<compile_context>
chip_gen: v7x
topology: tpu7x:2x2x1
jax: 0.10.0
libtpu: 0.0.40
codegen_flags: <defaults>
</compile_context>

<pallas_src>
import math
import functools

import jax
import jax.numpy as jnp
from jax import lax
from jax.experimental import pallas as pl
from jax.experimental.pallas import tpu as pltpu

# ----------------------------- model constants -------------------------------
N_DIMS = 3            # spatial dims
IN_NODE_NF = 5        # node feature (one-hot) dims
D = N_DIMS + IN_NODE_NF   # 8
HID = 32              # hidden width of synthetic dynamics MLP
T_STEPS = 1000        # diffusion timesteps
NORM_VALUES = (2.0, 4.0, 1.0)
NORM_BIASES = (None, 0.0, 0.0)
EPSILON = 1e-10


def _erf(x):
    # Abramowitz & Stegun 7.1.26 polynomial approximation (exp/abs only — safe in Mosaic).
    # TODO(synk): torch.erf is exact; this approximation has ~1.5e-7 max abs error.
    a1, a2, a3, a4, a5 = 0.254829592, -0.284496736, 1.421413741, -1.453152027, 1.061405429
    p = 0.3275911
    s = jnp.where(x >= 0.0, 1.0, -1.0)
    ax = jnp.abs(x)
    t = pl.reciprocal(1.0 + p * ax, approx=True)      # EUP approx reciprocal (was a VALU divide)
    y = 1.0 - ((((a5 * t + a4) * t + a3) * t + a2) * t + a1) * t * jnp.exp(-ax * ax)
    return s * y


def _cdf_std_gaussian(x):
    return 0.5 * (1.0 + _erf(x * (1.0 / math.sqrt(2.0))))


# --------------------------------- kernel ------------------------------------
def edm_kernel(slab_ref, oh_ref, gmeta_ref, w1_ref, b1_ref, w2_ref, b2_ref, out_ref):
    nv0, nv1, nv2 = NORM_VALUES
    nb1, nb2 = NORM_BIASES[1], NORM_BIASES[2]
    f32 = jnp.float32

    slab = slab_ref[...]          # (N, 19)
    oh = oh_ref[...]              # (N, B)
    gmeta = gmeta_ref[...]        # (B, 8): [gamma_t, gamma_s, gamma_0, gamma_1, t, t_is_zero, 0, 0]

    xh_raw = slab[:, 0:D]                       # (N, 8)   raw [x | h]
    noise = slab[:, D:2 * D]                    # (N, 8)
    lig = slab[:, 2 * D:2 * D + 1]              # (N, 1)
    ctx = slab[:, 2 * D + 1:2 * D + 2]          # (N, 1)
    site = slab[:, 2 * D + 2:2 * D + 3]         # (N, 1)

    # ---- normalize (x cols /nv0, h cols (h-nb1)/nv1) — per-lane scale, no concat -----------
    lane = lax.broadcasted_iota(jnp.int32, (1, D), 1)
    inv_norm = jnp.where(lane < N_DIMS, 1.0 / nv0, 1.0 / nv1)
    bias = jnp.where(lane < N_DIMS, 0.0, nb1)
    xh = (xh_raw - bias) * inv_norm             # (N, 8)
    site_n = (site - nb2) * (1.0 / nv2)

    # ---- single batched segment gather: all per-graph scalars at once ----------------------
    g_nodes = jnp.dot(oh, gmeta, preferred_element_type=f32)   # (N, 8)
    sig_pos = jax.nn.sigmoid(g_nodes)
    sig_neg = jax.nn.sigmoid(-g_nodes)
    alpha_t_n = jnp.sqrt(sig_neg[:, 0:1])       # alpha(gamma_t)[batch_seg]
    sigma_t_n = jnp.sqrt(sig_pos[:, 0:1])       # sigma(gamma_t)[batch_seg]
    alpha_T_n = jnp.sqrt(sig_neg[:, 3:4])       # alpha(gamma_1)[batch_seg]
    t_n = g_nodes[:, 4:5]                       # t[batch_seg]

    # ---- noised representation --------------------------------------------------------------
    eps_t = noise * lig
    z_t = alpha_t_n * xh + sigma_t_n * eps_t
    z_t = xh * ctx + z_t * lig

    # ---- synthetic dynamics (2-layer MLP on MXU, bf16 operands, W1 applied split) -----------
    w1 = w1_ref[...]                            # (D+2, HID) bf16
    hid = jnp.tanh(
        jnp.dot(z_t.astype(jnp.bfloat16), w1[0:D, :], preferred_element_type=f32)
        + t_n * w1[D:D + 1, :].astype(f32)
        + site_n * w1[D + 1:D + 2, :].astype(f32)
        + b1_ref[...])
    eps_hat = (jnp.dot(hid.astype(jnp.bfloat16), w2_ref[...], preferred_element_type=f32)
               + b2_ref[...]) * lig             # (N, 8)

    # ---- per-node reduction terms ------------------------------------------------------------
    sq_err = (eps_t - eps_hat) ** 2             # (N, 8)
    mu_T = alpha_T_n * xh
    musq_lig = (mu_T ** 2) * lig                # (N, 8)

    # discretized-Gaussian log-prob of h (training branch: gamma_0 := gamma_t)
    z_h = z_t[:, N_DIMS:]
    h_n = xh[:, N_DIMS:]
    h_orig = h_n * nv1 + nb1
    est_h = z_h * nv1 + nb1
    centered = est_h - 1.0
    inv_sigma0_n = pl.reciprocal(sigma_t_n * nv1, approx=True)   # 1/(sigma(gamma_t)[seg]*norm)
    log_p_h_prop = jnp.log(
        _cdf_std_gaussian((centered + 0.5) * inv_sigma0_n)
        - _cdf_std_gaussian((centered - 0.5) * inv_sigma0_n)
        + EPSILON)
    m = jnp.max(log_p_h_prop, axis=1, keepdims=True)
    log_Z = m + jnp.log(jnp.sum(jnp.exp(log_p_h_prop - m), axis=1, keepdims=True))
    log_probs = log_p_h_prop - log_Z
    logph_term = log_probs * h_orig * lig       # (N, 5)

    # ---- single batched segment scatter-add (contract N of onehot; no onehot^T input) -------
    seg_in = jnp.concatenate([lig, sq_err, musq_lig, logph_term], axis=1)   # (N, 22)
    seg_out = lax.dot_general(oh, seg_in, (((0,), (0,)), ((), ())),
                              preferred_element_type=f32)                   # (B, 22)

    lig_count = seg_out[:, 0:1]
    err_cols = seg_out[:, 1:1 + D]
    error_t = jnp.sum(err_cols, axis=1, keepdims=True)
    err_x = jnp.sum(err_cols[:, 0:N_DIMS], axis=1, keepdims=True)
    musq_cols = seg_out[:, 1 + D:1 + 2 * D]
    mu_norm2_x = jnp.sum(musq_cols[:, 0:N_DIMS], axis=1, keepdims=True)
    mu_norm2_h = jnp.sum(musq_cols[:, N_DIMS:], axis=1, keepdims=True)
    log_p_h = jnp.sum(seg_out[:, 1 + 2 * D:1 + 2 * D + IN_NODE_NF], axis=1, keepdims=True)

    # ---- graph-level loss terms ---------------------------------------------------------------
    gamma_t = gmeta[:, 0:1]
    gamma_s = gmeta[:, 1:2]
    gamma_0 = gmeta[:, 2:3]
    gamma_1 = gmeta[:, 3:4]
    t_is_zero = gmeta[:, 5:6]
    t_is_not_zero = 1.0 - t_is_zero

    # matches torch forward's inline expression (positive sign, no (n-1)):
    delta_log_px = N_DIMS * lig_count * math.log(nv0)
    # SNR_weight is left unmasked at t_int==0 (gamma_s wraps to gamma[T]) — same as torch.
    snr_w = jnp.exp(-(gamma_s - gamma_t)) - 1.0

    dof_x = N_DIMS * (lig_count - 1.0)
    log_sigma_x = 0.5 * gamma_0
    neg_log_const = -(dof_x * (-log_sigma_x - 0.5 * math.log(2.0 * math.pi)))

    sigma_T = jnp.sqrt(jax.nn.sigmoid(gamma_1))
    log_inv_sigma_T = -jnp.log(sigma_T)
    # torch gaussian_KL is called with d=1 for the h-part — reproduced verbatim.
    kl_h = log_inv_sigma_T + 0.5 * (sigma_T ** 2 + mu_norm2_h) - 0.5
    kl_x = dof_x * log_inv_sigma_T + 0.5 * (dof_x * sigma_T ** 2 + mu_norm2_x) - 0.5 * dof_x
    kl_prior = kl_x + kl_h

    log_p_x = -0.5 * err_x
    loss_0_x = -log_p_x * t_is_zero
    loss_0_h = -log_p_h * t_is_zero
    error_t = error_t * t_is_not_zero

    # ---- single merged output store (B, 8): lane j = j-th loss term, lane 7 unused -----------
    out_ref[...] = jnp.concatenate(
        [delta_log_px, error_t, snr_w, loss_0_x, loss_0_h, neg_log_const, kl_prior,
         jnp.zeros_like(kl_prior)], axis=1)


# --------------------------------- wrapper -----------------------------------
def polynomial_gamma_table(T, s=1e-4, power=2.0):
    tt = jnp.arange(T + 1, dtype=jnp.float32) / T
    alphas2 = (1.0 - tt ** power) ** 2
    precision = 1.0 - 2.0 * s
    alphas2 = precision * alphas2 + s
    sigmas2 = 1.0 - alphas2
    return (jnp.log(sigmas2) - jnp.log(alphas2)).astype(jnp.float32)


@functools.partial(jax.jit, static_argnames=("batch_size",))
def edm_forward(x, h, context, ligand_diff, ligand_site, batch_seg, batch_size,
                t_int, noise, w1, b1, w2, b2):
    B = batch_size
    f32 = jnp.float32

    # glue: lane-dense node slab, segment one-hot, per-graph scalar block
    slab = jnp.concatenate(
        [x, h, noise, ligand_diff, context, ligand_site], axis=1).astype(f32)    # (N, 19)
    onehot = (batch_seg[:, None] == jnp.arange(B)[None, :]).astype(f32)          # (N, B)

    gamma_table = polynomial_gamma_table(T_STEPS)
    s_int = t_int - 1
    t = t_int.astype(f32) / T_STEPS                                              # (B, 1)
    t_is_zero = (t_int == 0).astype(f32)                                         # (B, 1)
    gamma_t = jnp.take(gamma_table, t_int[:, 0], mode="wrap")[:, None]
    gamma_s = jnp.take(gamma_table, s_int[:, 0], mode="wrap")[:, None]           # idx -1 wraps (== torch)
    gamma_0 = jnp.full((B, 1), gamma_table[0], dtype=f32)
    gamma_1 = jnp.full((B, 1), gamma_table[T_STEPS], dtype=f32)
    zeros_b = jnp.zeros((B, 1), dtype=f32)
    gmeta = jnp.concatenate(
        [gamma_t, gamma_s, gamma_0, gamma_1, t, t_is_zero, zeros_b, zeros_b], axis=1)  # (B, 8)

    inputs = (slab, onehot, gmeta,
              w1.astype(jnp.bfloat16), b1.astype(f32),
              w2.astype(jnp.bfloat16), b2.astype(f32))

    def full_spec(shape):
        return pl.BlockSpec(shape, lambda i: tuple(0 for _ in shape))

    out = pl.pallas_call(
        edm_kernel,
        out_shape=jax.ShapeDtypeStruct((B, 8), f32),
        grid=(1,),
        in_specs=[full_spec(a.shape) for a in inputs],
        out_specs=full_spec((B, 8)),
        compiler_params=pltpu.CompilerParams(
            dimension_semantics=("arbitrary",),
            vmem_limit_bytes=32 * 1024 * 1024),
    )(*inputs)

    # (delta_log_px, error_t, SNR_weight, loss_0_x, loss_0_h, neg_log_constants, kl_prior)
    return tuple(out[:, j] for j in range(7))


# ----------------------------------- main -------------------------------------
if __name__ == "__main__":
    key = jax.random.PRNGKey(0)
    kx, kh, klig, ksite, kt, kn, kw1, kb1, kw2, kb2 = jax.random.split(key, 10)

    B = 4          # batch (graphs)
    NPG = 4        # nodes per graph
    N = B * NPG    # total nodes

    batch_seg = jnp.repeat(jnp.arange(B, dtype=jnp.int32), NPG)           # (N,)
    x = jax.random.normal(kx, (N, N_DIMS), dtype=jnp.float32)
    h = jax.nn.one_hot(jax.random.randint(kh, (N,), 0, IN_NODE_NF),
                       IN_NODE_NF, dtype=jnp.float32)                     # (N, F)
    ligand_diff = (jax.random.uniform(klig, (N, 1)) > 0.5).astype(jnp.float32)
    context = 1.0 - ligand_diff
    ligand_site = (jax.random.uniform(ksite, (N, 1)) > 0.5).astype(jnp.float32)

    # randomness that torch draws inside forward() — drawn deterministically here
    t_int = jax.random.randint(kt, (B, 1), 0, T_STEPS + 1)                # training: lowest_t = 0
    noise = jax.random.normal(kn, (N, D), dtype=jnp.float32)

    # synthetic dynamics MLP parameters (deterministic init)
    w1 = jax.random.normal(kw1, (D + 2, HID), dtype=jnp.float32) * 0.2
    b1 = jax.random.normal(kb1, (1, HID), dtype=jnp.float32) * 0.05
    w2 = jax.random.normal(kw2, (HID, D), dtype=jnp.float32) * 0.2
    b2 = jax.random.normal(kb2, (1, D), dtype=jnp.float32) * 0.05

    loss_terms = edm_forward(x, h, context, ligand_diff, ligand_site, batch_seg, B,
                             t_int, noise, w1, b1, w2, b2)
    loss_terms = jax.block_until_ready(loss_terms)

    names = ("delta_log_px", "error_t", "SNR_weight", "loss_0_x",
             "loss_0_h", "neg_log_constants", "kl_prior")
    for nme, v in zip(names, loss_terms):
        assert v.shape == (B,) and bool(jnp.all(jnp.isfinite(v))), nme

    print("KERNEL_OK")
</pallas_src>

<mosaic_0001>
module attributes {stable_mosaic.version = 11 : i64} {
  func.func @edm_kernel(%arg0: i32, %arg1: memref<16x19xf32, #tpu.memory_space<vmem>>, %arg2: memref<16x4xf32, #tpu.memory_space<vmem>>, %arg3: memref<4x8xf32, #tpu.memory_space<vmem>>, %arg4: memref<10x32xbf16, #tpu.memory_space<vmem>>, %arg5: memref<1x32xf32, #tpu.memory_space<vmem>>, %arg6: memref<32x8xbf16, #tpu.memory_space<vmem>>, %arg7: memref<1x8xf32, #tpu.memory_space<vmem>>, %arg8: memref<4x8xf32, #tpu.memory_space<vmem>>) attributes {dimension_semantics = [#tpu.dimension_semantics<arbitrary>], iteration_bounds = array<i64: 1>, scalar_prefetch = 0 : i64, scratch_operands = 0 : i64, tpu.core_type = #tpu.core_type<tc>, window_params = [{pipeline_mode = #tpu.pipeline_mode<synchronous>, transform_indices = @transform_0, window_bounds = array<i64: 16, 19>}, {pipeline_mode = #tpu.pipeline_mode<synchronous>, transform_indices = @transform_1, window_bounds = array<i64: 16, 4>}, {pipeline_mode = #tpu.pipeline_mode<synchronous>, transform_indices = @transform_2, window_bounds = array<i64: 4, 8>}, {pipeline_mode = #tpu.pipeline_mode<synchronous>, transform_indices = @transform_3, window_bounds = array<i64: 10, 32>}, {pipeline_mode = #tpu.pipeline_mode<synchronous>, transform_indices = @transform_4, window_bounds = array<i64: 1, 32>}, {pipeline_mode = #tpu.pipeline_mode<synchronous>, transform_indices = @transform_5, window_bounds = array<i64: 32, 8>}, {pipeline_mode = #tpu.pipeline_mode<synchronous>, transform_indices = @transform_6, window_bounds = array<i64: 1, 8>}, {pipeline_mode = #tpu.pipeline_mode<synchronous>, transform_indices = @transform_7, window_bounds = array<i64: 4, 8>}]} {
    %c0 = arith.constant 0 : index
    %c0_0 = arith.constant 0 : index
    %0 = vector.load %arg1[%c0, %c0_0] : memref<16x19xf32, #tpu.memory_space<vmem>>, vector<16x19xf32>
    %c0_1 = arith.constant 0 : index
    %c0_2 = arith.constant 0 : index
    %1 = vector.load %arg2[%c0_1, %c0_2] : memref<16x4xf32, #tpu.memory_space<vmem>>, vector<16x4xf32>
    %c0_3 = arith.constant 0 : index
    %c0_4 = arith.constant 0 : index
    %2 = vector.load %arg3[%c0_3, %c0_4] : memref<4x8xf32, #tpu.memory_space<vmem>>, vector<4x8xf32>
    %3 = vector.extract_strided_slice %0 {offsets = [0, 0], sizes = [16, 8], strides = [1, 1]} : vector<16x19xf32> to vector<16x8xf32>
    %4 = vector.extract_strided_slice %0 {offsets = [0, 8], sizes = [16, 8], strides = [1, 1]} : vector<16x19xf32> to vector<16x8xf32>
    %5 = vector.extract_strided_slice %0 {offsets = [0, 16], sizes = [16, 1], strides = [1, 1]} : vector<16x19xf32> to vector<16x1xf32>
    %6 = vector.extract_strided_slice %0 {offsets = [0, 17], sizes = [16, 1], strides = [1, 1]} : vector<16x19xf32> to vector<16x1xf32>
    %7 = vector.extract_strided_slice %0 {offsets = [0, 18], sizes = [16, 1], strides = [1, 1]} : vector<16x19xf32> to vector<16x1xf32>
    %8 = tpu.iota {dimensions = array<i32: 1>} : vector<1x8xi32>
    %c3_i32 = arith.constant 3 : i32
    %9 = vector.broadcast %c3_i32 : i32 to vector<1x8xi32>
    %10 = arith.cmpi slt, %8, %9 : vector<1x8xi32>
    %cst = arith.constant 5.000000e-01 : f32
    %cst_5 = arith.constant 2.500000e-01 : f32
    %11 = vector.broadcast %cst : f32 to vector<1x8xf32>
    %12 = vector.broadcast %cst_5 : f32 to vector<1x8xf32>
    %13 = arith.select %10, %11, %12 : vector<1x8xi1>, vector<1x8xf32>
    %c3_i32_6 = arith.constant 3 : i32
    %14 = vector.broadcast %c3_i32_6 : i32 to vector<1x8xi32>
    %15 = arith.cmpi slt, %8, %14 : vector<1x8xi32>
    %cst_7 = arith.constant 0.000000e+00 : f32
    %cst_8 = arith.constant 0.000000e+00 : f32
    %16 = vector.broadcast %cst_7 : f32 to vector<1x8xf32>
    %17 = vector.broadcast %cst_8 : f32 to vector<1x8xf32>
    %18 = arith.select %15, %16, %17 : vector<1x8xi1>, vector<1x8xf32>
    %19 = vector.broadcast %18 : vector<1x8xf32> to vector<16x8xf32>
    %20 = arith.subf %3, %19 : vector<16x8xf32>
    %21 = vector.broadcast %13 : vector<1x8xf32> to vector<16x8xf32>
    %22 = arith.mulf %20, %21 : vector<16x8xf32>
    %cst_9 = arith.constant 0.000000e+00 : f32
    %23 = vector.broadcast %cst_9 : f32 to vector<16x1xf32>
    %24 = arith.subf %7, %23 : vector<16x1xf32>
    %cst_10 = arith.constant 1.000000e+00 : f32
    %25 = vector.broadcast %cst_10 : f32 to vector<16x1xf32>
    %26 = arith.mulf %24, %25 : vector<16x1xf32>
    %cst_11 = arith.constant dense<0.000000e+00> : vector<16x8xf32>
    %27 = tpu.matmul %1, %2, %cst_11 {dimension_numbers = #tpu.dot_dimension_numbers<[1], [0], [0], [1], [0, 0, 1, 1], [], []>} : vector<16x4xf32>, vector<4x8xf32>, vector<16x8xf32> -> vector<16x8xf32>
    %28 = arith.negf %27 : vector<16x8xf32>
    %29 = math.exp %28 : vector<16x8xf32>
    %cst_12 = arith.constant 1.000000e+00 : f32
    %30 = vector.broadcast %cst_12 : f32 to vector<16x8xf32>
    %31 = arith.addf %30, %29 : vector<16x8xf32>
    %32 = arith.divf %30, %31 : vector<16x8xf32>
    %cst_13 = arith.constant 0.000000e+00 : f32
    %33 = vector.broadcast %cst_13 : f32 to vector<16x8xf32>
    %34 = arith.subf %33, %27 : vector<16x8xf32>
    %35 = arith.negf %34 : vector<16x8xf32>
    %36 = math.exp %35 : vector<16x8xf32>
    %cst_14 = arith.constant 1.000000e+00 : f32
    %37 = vector.broadcast %cst_14 : f32 to vector<16x8xf32>
    %38 = arith.addf %37, %36 : vector<16x8xf32>
    %39 = arith.divf %37, %38 : vector<16x8xf32>
    %40 = vector.extract_strided_slice %39 {offsets = [0, 0], sizes = [16, 1], strides = [1, 1]} : vector<16x8xf32> to vector<16x1xf32>
    %41 = math.sqrt %40 : vector<16x1xf32>
    %42 = vector.extract_strided_slice %32 {offsets = [0, 0], sizes = [16, 1], strides = [1, 1]} : vector<16x8xf32> to vector<16x1xf32>
    %43 = math.sqrt %42 : vector<16x1xf32>
    %44 = vector.extract_strided_slice %39 {offsets = [0, 3], sizes = [16, 1], strides = [1, 1]} : vector<16x8xf32> to vector<16x1xf32>
    %45 = math.sqrt %44 : vector<16x1xf32>
    %46 = vector.extract_strided_slice %27 {offsets = [0, 4], sizes = [16, 1], strides = [1, 1]} : vector<16x8xf32> to vector<16x1xf32>
    %47 = vector.broadcast %5 : vector<16x1xf32> to vector<16x8xf32>
    %48 = arith.mulf %4, %47 : vector<16x8xf32>
    %49 = vector.broadcast %41 : vector<16x1xf32> to vector<16x8xf32>
    %50 = arith.mulf %49, %22 : vector<16x8xf32>
    %51 = vector.broadcast %43 : vector<16x1xf32> to vector<16x8xf32>
    %52 = arith.mulf %51, %48 : vector<16x8xf32>
    %53 = arith.addf %50, %52 : vector<16x8xf32>
    %54 = vector.broadcast %6 : vector<16x1xf32> to vector<16x8xf32>
    %55 = arith.mulf %22, %54 : vector<16x8xf32>
    %56 = vector.broadcast %5 : vector<16x1xf32> to vector<16x8xf32>
    %57 = arith.mulf %53, %56 : vector<16x8xf32>
    %58 = arith.addf %55, %57 : vector<16x8xf32>
    %c0_15 = arith.constant 0 : index
    %c0_16 = arith.constant 0 : index
    %59 = vector.load %arg4[%c0_15, %c0_16] : memref<10x32xbf16, #tpu.memory_space<vmem>>, vector<10x32xbf16>
    %60 = arith.truncf %58 : vector<16x8xf32> to vector<16x8xbf16>
    %61 = vector.extract_strided_slice %59 {offsets = [0, 0], sizes = [8, 32], strides = [1, 1]} : vector<10x32xbf16> to vector<8x32xbf16>
    %cst_17 = arith.constant dense<0.000000e+00> : vector<16x32xf32>
    %62 = tpu.matmul %60, %61, %cst_17 {dimension_numbers = #tpu.dot_dimension_numbers<[1], [0], [0], [1], [0, 0, 1, 1], [], []>} : vector<16x8xbf16>, vector<8x32xbf16>, vector<16x32xf32> -> vector<16x32xf32>
    %63 = vector.extract_strided_slice %59 {offsets = [8, 0], sizes = [1, 32], strides = [1, 1]} : vector<10x32xbf16> to vector<1x32xbf16>
    %64 = arith.extf %63 : vector<1x32xbf16> to vector<1x32xf32>
    %65 = vector.broadcast %46 : vector<16x1xf32> to vector<16x32xf32>
    %66 = vector.broadcast %64 : vector<1x32xf32> to vector<16x32xf32>
    %67 = arith.mulf %65, %66 : vector<16x32xf32>
    %68 = arith.addf %62, %67 : vector<16x32xf32>
    %69 = vector.extract_strided_slice %59 {offsets = [9, 0], sizes = [1, 32], strides = [1, 1]} : vector<10x32xbf16> to vector<1x32xbf16>
    %70 = arith.extf %69 : vector<1x32xbf16> to vector<1x32xf32>
    %71 = vector.broadcast %26 : vector<16x1xf32> to vector<16x32xf32>
    %72 = vector.broadcast %70 : vector<1x32xf32> to vector<16x32xf32>
    %73 = arith.mulf %71, %72 : vector<16x32xf32>
    %74 = arith.addf %68, %73 : vector<16x32xf32>
    %c0_18 = arith.constant 0 : index
    %c0_19 = arith.constant 0 : index
    %75 = vector.load %arg5[%c0_18, %c0_19] : memref<1x32xf32, #tpu.memory_space<vmem>>, vector<1x32xf32>
    %76 = vector.broadcast %75 : vector<1x32xf32> to vector<16x32xf32>
    %77 = arith.addf %74, %76 : vector<16x32xf32>
    %78 = math.tanh %77 : vector<16x32xf32>
    %79 = arith.truncf %78 : vector<16x32xf32> to vector<16x32xbf16>
    %c0_20 = arith.constant 0 : index
    %c0_21 = arith.constant 0 : index
    %80 = vector.load %arg6[%c0_20, %c0_21] : memref<32x8xbf16, #tpu.memory_space<vmem>>, vector<32x8xbf16>
    %cst_22 = arith.constant dense<0.000000e+00> : vector<16x8xf32>
    %81 = tpu.matmul %79, %80, %cst_22 {dimension_numbers = #tpu.dot_dimension_numbers<[1], [0], [0], [1], [0, 0, 1, 1], [], []>} : vector<16x32xbf16>, vector<32x8xbf16>, vector<16x8xf32> -> vector<16x8xf32>
    %c0_23 = arith.constant 0 : index
    %c0_24 = arith.constant 0 : index
    %82 = vector.load %arg7[%c0_23, %c0_24] : memref<1x8xf32, #tpu.memory_space<vmem>>, vector<1x8xf32>
    %83 = vector.broadcast %82 : vector<1x8xf32> to vector<16x8xf32>
    %84 = arith.addf %81, %83 : vector<16x8xf32>
    %85 = vector.broadcast %5 : vector<16x1xf32> to vector<16x8xf32>
    %86 = arith.mulf %84, %85 : vector<16x8xf32>
    %87 = arith.subf %48, %86 : vector<16x8xf32>
    %88 = arith.mulf %87, %87 : vector<16x8xf32>
    %89 = vector.broadcast %45 : vector<16x1xf32> to vector<16x8xf32>
    %90 = arith.mulf %89, %22 : vector<16x8xf32>
    %91 = arith.mulf %90, %90 : vector<16x8xf32>
    %92 = vector.broadcast %5 : vector<16x1xf32> to vector<16x8xf32>
    %93 = arith.mulf %91, %92 : vector<16x8xf32>
    %94 = vector.extract_strided_slice %58 {offsets = [0, 3], sizes = [16, 5], strides = [1, 1]} : vector<16x8xf32> to vector<16x5xf32>
    %95 = vector.extract_strided_slice %22 {offsets = [0, 3], sizes = [16, 5], strides = [1, 1]} : vector<16x8xf32> to vector<16x5xf32>
    %cst_25 = arith.constant 4.000000e+00 : f32
    %96 = vector.broadcast %cst_25 : f32 to vector<16x5xf32>
    %97 = arith.mulf %95, %96 : vector<16x5xf32>
    %cst_26 = arith.constant 0.000000e+00 : f32
    %98 = vector.broadcast %cst_26 : f32 to vector<16x5xf32>
    %99 = arith.addf %97, %98 : vector<16x5xf32>
    %cst_27 = arith.constant 4.000000e+00 : f32
    %100 = vector.broadcast %cst_27 : f32 to vector<16x5xf32>
    %101 = arith.mulf %94, %100 : vector<16x5xf32>
    %cst_28 = arith.constant 0.000000e+00 : f32
    %102 = vector.broadcast %cst_28 : f32 to vector<16x5xf32>
    %103 = arith.addf %101, %102 : vector<16x5xf32>
    %cst_29 = arith.constant 1.000000e+00 : f32
    %104 = vector.broadcast %cst_29 : f32 to vector<16x5xf32>
    %105 = arith.subf %103, %104 : vector<16x5xf32>
    %cst_30 = arith.constant 4.000000e+00 : f32
    %106 = vector.broadcast %cst_30 : f32 to vector<16x1xf32>
    %107 = arith.mulf %43, %106 : vector<16x1xf32>
    %108 = tpu.reciprocal %107 {approx = true} : vector<16x1xf32> -> vector<16x1xf32>
    %cst_31 = arith.constant 5.000000e-01 : f32
    %109 = vector.broadcast %cst_31 : f32 to vector<16x5xf32>
    %110 = arith.addf %105, %109 : vector<16x5xf32>
    %111 = vector.broadcast %108 : vector<16x1xf32> to vector<16x5xf32>
    %112 = arith.mulf %110, %111 : vector<16x5xf32>
    %cst_32 = arith.constant 0.707106769 : f32
    %113 = vector.broadcast %cst_32 : f32 to vector<16x5xf32>
    %114 = arith.mulf %112, %113 : vector<16x5xf32>
    %cst_33 = arith.constant 0.000000e+00 : f32
    %115 = vector.broadcast %cst_33 : f32 to vector<16x5xf32>
    %116 = arith.cmpf oge, %114, %115 : vector<16x5xf32>
    %cst_34 = arith.constant 1.000000e+00 : f32
    %cst_35 = arith.constant -1.000000e+00 : f32
    %117 = vector.broadcast %cst_34 : f32 to vector<16x5xf32>
    %118 = vector.broadcast %cst_35 : f32 to vector<16x5xf32>
    %119 = arith.select %116, %117, %118 : vector<16x5xi1>, vector<16x5xf32>
    %120 = math.absf %114 : vector<16x5xf32>
    %cst_36 = arith.constant 0.327591091 : f32
    %121 = vector.broadcast %cst_36 : f32 to vector<16x5xf32>
    %122 = arith.mulf %121, %120 : vector<16x5xf32>
    %cst_37 = arith.constant 1.000000e+00 : f32
    %123 = vector.broadcast %cst_37 : f32 to vector<16x5xf32>
    %124 = arith.addf %123, %122 : vector<16x5xf32>
    %125 = tpu.reciprocal %124 {approx = true} : vector<16x5xf32> -> vector<16x5xf32>
    %cst_38 = arith.constant 1.06140542 : f32
    %126 = vector.broadcast %cst_38 : f32 to vector<16x5xf32>
    %127 = arith.mulf %126, %125 : vector<16x5xf32>
    %cst_39 = arith.constant -1.45315206 : f32
    %128 = vector.broadcast %cst_39 : f32 to vector<16x5xf32>
    %129 = arith.addf %127, %128 : vector<16x5xf32>
    %130 = arith.mulf %129, %125 : vector<16x5xf32>
    %cst_40 = arith.constant 1.42141378 : f32
    %131 = vector.broadcast %cst_40 : f32 to vector<16x5xf32>
    %132 = arith.addf %130, %131 : vector<16x5xf32>
    %133 = arith.mulf %132, %125 : vector<16x5xf32>
    %cst_41 = arith.constant -0.284496725 : f32
    %134 = vector.broadcast %cst_41 : f32 to vector<16x5xf32>
    %135 = arith.addf %133, %134 : vector<16x5xf32>
    %136 = arith.mulf %135, %125 : vector<16x5xf32>
    %cst_42 = arith.constant 0.254829586 : f32
    %137 = vector.broadcast %cst_42 : f32 to vector<16x5xf32>
    %138 = arith.addf %136, %137 : vector<16x5xf32>
    %139 = arith.mulf %138, %125 : vector<16x5xf32>
    %cst_43 = arith.constant 0.000000e+00 : f32
    %140 = vector.broadcast %cst_43 : f32 to vector<16x5xf32>
    %141 = arith.subf %140, %120 : vector<16x5xf32>
    %142 = arith.mulf %141, %120 : vector<16x5xf32>
    %143 = math.exp %142 : vector<16x5xf32>
    %144 = arith.mulf %139, %143 : vector<16x5xf32>
    %cst_44 = arith.constant 1.000000e+00 : f32
    %145 = vector.broadcast %cst_44 : f32 to vector<16x5xf32>
    %146 = arith.subf %145, %144 : vector<16x5xf32>
    %147 = arith.mulf %119, %146 : vector<16x5xf32>
    %cst_45 = arith.constant 1.000000e+00 : f32
    %148 = vector.broadcast %cst_45 : f32 to vector<16x5xf32>
    %149 = arith.addf %148, %147 : vector<16x5xf32>
    %cst_46 = arith.constant 5.000000e-01 : f32
    %150 = vector.broadcast %cst_46 : f32 to vector<16x5xf32>
    %151 = arith.mulf %150, %149 : vector<16x5xf32>
    %cst_47 = arith.constant 5.000000e-01 : f32
    %152 = vector.broadcast %cst_47 : f32 to vector<16x5xf32>
    %153 = arith.subf %105, %152 : vector<16x5xf32>
    %154 = vector.broadcast %108 : vector<16x1xf32> to vector<16x5xf32>
    %155 = arith.mulf %153, %154 : vector<16x5xf32>
    %cst_48 = arith.constant 0.707106769 : f32
    %156 = vector.broadcast %cst_48 : f32 to vector<16x5xf32>
    %157 = arith.mulf %155, %156 : vector<16x5xf32>
    %cst_49 = arith.constant 0.000000e+00 : f32
    %158 = vector.broadcast %cst_49 : f32 to vector<16x5xf32>
    %159 = arith.cmpf oge, %157, %158 : vector<16x5xf32>
    %cst_50 = arith.constant 1.000000e+00 : f32
    %cst_51 = arith.constant -1.000000e+00 : f32
    %160 = vector.broadcast %cst_50 : f32 to vector<16x5xf32>
    %161 = vector.broadcast %cst_51 : f32 to vector<16x5xf32>
    %162 = arith.select %159, %160, %161 : vector<16x5xi1>, vector<16x5xf32>
    %163 = math.absf %157 : vector<16x5xf32>
    %cst_52 = arith.constant 0.327591091 : f32
    %164 = vector.broadcast %cst_52 : f32 to vector<16x5xf32>
    %165 = arith.mulf %164, %163 : vector<16x5xf32>
    %cst_53 = arith.constant 1.000000e+00 : f32
    %166 = vector.broadcast %cst_53 : f32 to vector<16x5xf32>
    %167 = arith.addf %166, %165 : vector<16x5xf32>
    %168 = tpu.reciprocal %167 {approx = true} : vector<16x5xf32> -> vector<16x5xf32>
    %cst_54 = arith.constant 1.06140542 : f32
    %169 = vector.broadcast %cst_54 : f32 to vector<16x5xf32>
    %170 = arith.mulf %169, %168 : vector<16x5xf32>
    %cst_55 = arith.constant -1.45315206 : f32
    %171 = vector.broadcast %cst_55 : f32 to vector<16x5xf32>
    %172 = arith.addf %170, %171 : vector<16x5xf32>
    %173 = arith.mulf %172, %168 : vector<16x5xf32>
    %cst_56 = arith.constant 1.42141378 : f32
    %174 = vector.broadcast %cst_56 : f32 to vector<16x5xf32>
    %175 = arith.addf %173, %174 : vector<16x5xf32>
    %176 = arith.mulf %175, %168 : vector<16x5xf32>
    %cst_57 = arith.constant -0.284496725 : f32
    %177 = vector.broadcast %cst_57 : f32 to vector<16x5xf32>
    %178 = arith.addf %176, %177 : vector<16x5xf32>
    %179 = arith.mulf %178, %168 : vector<16x5xf32>
    %cst_58 = arith.constant 0.254829586 : f32
    %180 = vector.broadcast %cst_58 : f32 to vector<16x5xf32>
    %181 = arith.addf %179, %180 : vector<16x5xf32>
    %182 = arith.mulf %181, %168 : vector<16x5xf32>
    %cst_59 = arith.constant 0.000000e+00 : f32
    %183 = vector.broadcast %cst_59 : f32 to vector<16x5xf32>
    %184 = arith.subf %183, %163 : vector<16x5xf32>
    %185 = arith.mulf %184, %163 : vector<16x5xf32>
    %186 = math.exp %185 : vector<16x5xf32>
    %187 = arith.mulf %182, %186 : vector<16x5xf32>
    %cst_60 = arith.constant 1.000000e+00 : f32
    %188 = vector.broadcast %cst_60 : f32 to vector<16x5xf32>
    %189 = arith.subf %188, %187 : vector<16x5xf32>
    %190 = arith.mulf %162, %189 : vector<16x5xf32>
    %cst_61 = arith.constant 1.000000e+00 : f32
    %191 = vector.broadcast %cst_61 : f32 to vector<16x5xf32>
    %192 = arith.addf %191, %190 : vector<16x5xf32>
    %cst_62 = arith.constant 5.000000e-01 : f32
    %193 = vector.broadcast %cst_62 : f32 to vector<16x5xf32>
    %194 = arith.mulf %193, %192 : vector<16x5xf32>
    %195 = arith.subf %151, %194 : vector<16x5xf32>
    %cst_63 = arith.constant 1.000000e-10 : f32
    %196 = vector.broadcast %cst_63 : f32 to vector<16x5xf32>
    %197 = arith.addf %195, %196 : vector<16x5xf32>
    %198 = math.log %197 : vector<16x5xf32>
    %cst_64 = arith.constant dense<0xFF800000> : vector<16xf32>
    %199 = vector.multi_reduction <maximumf>, %198, %cst_64 [1] : vector<16x5xf32> to vector<16xf32>
    %200 = vector.shape_cast %199 : vector<16xf32> to vector<16x1xf32>
    %201 = vector.broadcast %200 : vector<16x1xf32> to vector<16x5xf32>
    %202 = arith.subf %198, %201 : vector<16x5xf32>
    %203 = math.exp %202 : vector<16x5xf32>
    %cst_65 = arith.constant dense<0.000000e+00> : vector<16xf32>
    %204 = vector.multi_reduction <add>, %203, %cst_65 [1] : vector<16x5xf32> to vector<16xf32>
    %205 = vector.shape_cast %204 : vector<16xf32> to vector<16x1xf32>
    %206 = math.log %205 : vector<16x1xf32>
    %207 = arith.addf %200, %206 : vector<16x1xf32>
    %208 = vector.broadcast %207 : vector<16x1xf32> to vector<16x5xf32>
    %209 = arith.subf %198, %208 : vector<16x5xf32>
    %210 = arith.mulf %209, %99 : vector<16x5xf32>
    %211 = vector.broadcast %5 : vector<16x1xf32> to vector<16x5xf32>
    %212 = arith.mulf %210, %211 : vector<16x5xf32>
    %213 = tpu.concatenate %5, %88, %93, %212 in 1 : vector<16x1xf32>, vector<16x8xf32>, vector<16x8xf32>, vector<16x5xf32> -> vector<16x22xf32>
    %cst_66 = arith.constant dense<0.000000e+00> : vector<4x22xf32>
    %214 = tpu.matmul %1, %213, %cst_66 {dimension_numbers = #tpu.dot_dimension_numbers<[0], [0], [1], [1], [0, 1, 1, 1], [], []>} : vector<16x4xf32>, vector<16x22xf32>, vector<4x22xf32> -> vector<4x22xf32>
    %215 = vector.extract_strided_slice %214 {offsets = [0, 0], sizes = [4, 1], strides = [1, 1]} : vector<4x22xf32> to vector<4x1xf32>
    %216 = vector.extract_strided_slice %214 {offsets = [0, 1], sizes = [4, 8], strides = [1, 1]} : vector<4x22xf32> to vector<4x8xf32>
    %cst_67 = arith.constant dense<0.000000e+00> : vector<4xf32>
    %217 = vector.multi_reduction <add>, %216, %cst_67 [1] : vector<4x8xf32> to vector<4xf32>
    %218 = vector.shape_cast %217 : vector<4xf32> to vector<4x1xf32>
    %219 = vector.extract_strided_slice %216 {offsets = [0, 0], sizes = [4, 3], strides = [1, 1]} : vector<4x8xf32> to vector<4x3xf32>
    %cst_68 = arith.constant dense<0.000000e+00> : vector<4xf32>
    %220 = vector.multi_reduction <add>, %219, %cst_68 [1] : vector<4x3xf32> to vector<4xf32>
    %221 = vector.shape_cast %220 : vector<4xf32> to vector<4x1xf32>
    %222 = vector.extract_strided_slice %214 {offsets = [0, 9], sizes = [4, 8], strides = [1, 1]} : vector<4x22xf32> to vector<4x8xf32>
    %223 = vector.extract_strided_slice %222 {offsets = [0, 0], sizes = [4, 3], strides = [1, 1]} : vector<4x8xf32> to vector<4x3xf32>
    %cst_69 = arith.constant dense<0.000000e+00> : vector<4xf32>
    %224 = vector.multi_reduction <add>, %223, %cst_69 [1] : vector<4x3xf32> to vector<4xf32>
    %225 = vector.shape_cast %224 : vector<4xf32> to vector<4x1xf32>
    %226 = vector.extract_strided_slice %222 {offsets = [0, 3], sizes = [4, 5], strides = [1, 1]} : vector<4x8xf32> to vector<4x5xf32>
    %cst_70 = arith.constant dense<0.000000e+00> : vector<4xf32>
    %227 = vector.multi_reduction <add>, %226, %cst_70 [1] : vector<4x5xf32> to vector<4xf32>
    %228 = vector.shape_cast %227 : vector<4xf32> to vector<4x1xf32>
    %229 = vector.extract_strided_slice %214 {offsets = [0, 17], sizes = [4, 5], strides = [1, 1]} : vector<4x22xf32> to vector<4x5xf32>
    %cst_71 = arith.constant dense<0.000000e+00> : vector<4xf32>
    %230 = vector.multi_reduction <add>, %229, %cst_71 [1] : vector<4x5xf32> to vector<4xf32>
    %231 = vector.shape_cast %230 : vector<4xf32> to vector<4x1xf32>
    %232 = vector.extract_strided_slice %2 {offsets = [0, 0], sizes = [4, 1], strides = [1, 1]} : vector<4x8xf32> to vector<4x1xf32>
    %233 = vector.extract_strided_slice %2 {offsets = [0, 1], sizes = [4, 1], strides = [1, 1]} : vector<4x8xf32> to vector<4x1xf32>
    %234 = vector.extract_strided_slice %2 {offsets = [0, 2], sizes = [4, 1], strides = [1, 1]} : vector<4x8xf32> to vector<4x1xf32>
    %235 = vector.extract_strided_slice %2 {offsets = [0, 3], sizes = [4, 1], strides = [1, 1]} : vector<4x8xf32> to vector<4x1xf32>
    %236 = vector.extract_strided_slice %2 {offsets = [0, 5], sizes = [4, 1], strides = [1, 1]} : vector<4x8xf32> to vector<4x1xf32>
    %cst_72 = arith.constant 1.000000e+00 : f32
    %237 = vector.broadcast %cst_72 : f32 to vector<4x1xf32>
    %238 = arith.subf %237, %236 : vector<4x1xf32>
    %cst_73 = arith.constant 3.000000e+00 : f32
    %239 = vector.broadcast %cst_73 : f32 to vector<4x1xf32>
    %240 = arith.mulf %239, %215 : vector<4x1xf32>
    %cst_74 = arith.constant 0.693147182 : f32
    %241 = vector.broadcast %cst_74 : f32 to vector<4x1xf32>
    %242 = arith.mulf %240, %241 : vector<4x1xf32>
    %243 = arith.subf %233, %232 : vector<4x1xf32>
    %cst_75 = arith.constant 0.000000e+00 : f32
    %244 = vector.broadcast %cst_75 : f32 to vector<4x1xf32>
    %245 = arith.subf %244, %243 : vector<4x1xf32>
    %246 = math.exp %245 : vector<4x1xf32>
    %cst_76 = arith.constant 1.000000e+00 : f32
    %247 = vector.broadcast %cst_76 : f32 to vector<4x1xf32>
    %248 = arith.subf %246, %247 : vector<4x1xf32>
    %cst_77 = arith.constant 1.000000e+00 : f32
    %249 = vector.broadcast %cst_77 : f32 to vector<4x1xf32>
    %250 = arith.subf %215, %249 : vector<4x1xf32>
    %cst_78 = arith.constant 3.000000e+00 : f32
    %251 = vector.broadcast %cst_78 : f32 to vector<4x1xf32>
    %252 = arith.mulf %251, %250 : vector<4x1xf32>
    %cst_79 = arith.constant 5.000000e-01 : f32
    %253 = vector.broadcast %cst_79 : f32 to vector<4x1xf32>
    %254 = arith.mulf %253, %234 : vector<4x1xf32>
    %cst_80 = arith.constant 0.000000e+00 : f32
    %255 = vector.broadcast %cst_80 : f32 to vector<4x1xf32>
    %256 = arith.subf %255, %254 : vector<4x1xf32>
    %cst_81 = arith.constant 0.918938517 : f32
    %257 = vector.broadcast %cst_81 : f32 to vector<4x1xf32>
    %258 = arith.subf %256, %257 : vector<4x1xf32>
    %259 = arith.mulf %252, %258 : vector<4x1xf32>
    %cst_82 = arith.constant 0.000000e+00 : f32
    %260 = vector.broadcast %cst_82 : f32 to vector<4x1xf32>
    %261 = arith.subf %260, %259 : vector<4x1xf32>
    %262 = arith.negf %235 : vector<4x1xf32>
    %263 = math.exp %262 : vector<4x1xf32>
    %cst_83 = arith.constant 1.000000e+00 : f32
    %264 = vector.broadcast %cst_83 : f32 to vector<4x1xf32>
    %265 = arith.addf %264, %263 : vector<4x1xf32>
    %266 = arith.divf %264, %265 : vector<4x1xf32>
    %267 = math.sqrt %266 : vector<4x1xf32>
    %268 = math.log %267 : vector<4x1xf32>
    %cst_84 = arith.constant 0.000000e+00 : f32
    %269 = vector.broadcast %cst_84 : f32 to vector<4x1xf32>
    %270 = arith.subf %269, %268 : vector<4x1xf32>
    %271 = arith.mulf %267, %267 : vector<4x1xf32>
    %272 = arith.addf %271, %228 : vector<4x1xf32>
    %cst_85 = arith.constant 5.000000e-01 : f32
    %273 = vector.broadcast %cst_85 : f32 to vector<4x1xf32>
    %274 = arith.mulf %273, %272 : vector<4x1xf32>
    %275 = arith.addf %270, %274 : vector<4x1xf32>
    %cst_86 = arith.constant 5.000000e-01 : f32
    %276 = vector.broadcast %cst_86 : f32 to vector<4x1xf32>
    %277 = arith.subf %275, %276 : vector<4x1xf32>
    %278 = arith.mulf %252, %270 : vector<4x1xf32>
    %279 = arith.mulf %267, %267 : vector<4x1xf32>
    %280 = arith.mulf %252, %279 : vector<4x1xf32>
    %281 = arith.addf %280, %225 : vector<4x1xf32>
    %cst_87 = arith.constant 5.000000e-01 : f32
    %282 = vector.broadcast %cst_87 : f32 to vector<4x1xf32>
    %283 = arith.mulf %282, %281 : vector<4x1xf32>
    %284 = arith.addf %278, %283 : vector<4x1xf32>
    %cst_88 = arith.constant 5.000000e-01 : f32
    %285 = vector.broadcast %cst_88 : f32 to vector<4x1xf32>
    %286 = arith.mulf %285, %252 : vector<4x1xf32>
    %287 = arith.subf %284, %286 : vector<4x1xf32>
    %288 = arith.addf %287, %277 : vector<4x1xf32>
    %cst_89 = arith.constant -5.000000e-01 : f32
    %289 = vector.broadcast %cst_89 : f32 to vector<4x1xf32>
    %290 = arith.mulf %289, %221 : vector<4x1xf32>
    %cst_90 = arith.constant 0.000000e+00 : f32
    %291 = vector.broadcast %cst_90 : f32 to vector<4x1xf32>
    %292 = arith.subf %291, %290 : vector<4x1xf32>
    %293 = arith.mulf %292, %236 : vector<4x1xf32>
    %cst_91 = arith.constant 0.000000e+00 : f32
    %294 = vector.broadcast %cst_91 : f32 to vector<4x1xf32>
    %295 = arith.subf %294, %231 : vector<4x1xf32>
    %296 = arith.mulf %295, %236 : vector<4x1xf32>
    %297 = arith.mulf %218, %238 : vector<4x1xf32>
    %cst_92 = arith.constant 0.000000e+00 : f32
    %298 = vector.broadcast %cst_92 : f32 to vector<4x1xf32>
    %299 = tpu.concatenate %242, %297, %248, %293, %296, %261, %288, %298 in 1 : vector<4x1xf32>, vector<4x1xf32>, vector<4x1xf32>, vector<4x1xf32>, vector<4x1xf32>, vector<4x1xf32>, vector<4x1xf32>, vector<4x1xf32> -> vector<4x8xf32>
    %c0_93 = arith.constant 0 : index
    %c0_94 = arith.constant 0 : index
    %300 = vector.load %arg8[%c0_93, %c0_94] : memref<4x8xf32, #tpu.memory_space<vmem>>, vector<4x8xf32>
    tpu.vector_store %arg8[%c0_93, %c0_94], %299 {strides = array<i32>} : memref<4x8xf32, #tpu.memory_space<vmem>>, vector<4x8xf32>,
    return
  }
  func.func @transform_0(%arg0: i32) -> (i32, i32) {
    %c0_i32 = arith.constant 0 : i32
    %c0_i32_0 = arith.constant 0 : i32
    %c0_i32_1 = arith.constant 0 : i32
    return %c0_i32, %c0_i32_0 : i32, i32
  }
  func.func @transform_1(%arg0: i32) -> (i32, i32) {
    %c0_i32 = arith.constant 0 : i32
    %c0_i32_0 = arith.constant 0 : i32
    %c0_i32_1 = arith.constant 0 : i32
    return %c0_i32, %c0_i32_0 : i32, i32
  }
  func.func @transform_2(%arg0: i32) -> (i32, i32) {
    %c0_i32 = arith.constant 0 : i32
    %c0_i32_0 = arith.constant 0 : i32
    %c0_i32_1 = arith.constant 0 : i32
    return %c0_i32, %c0_i32_0 : i32, i32
  }
  func.func @transform_3(%arg0: i32) -> (i32, i32) {
    %c0_i32 = arith.constant 0 : i32
    %c0_i32_0 = arith.constant 0 : i32
    %c0_i32_1 = arith.constant 0 : i32
    return %c0_i32, %c0_i32_0 : i32, i32
  }
  func.func @transform_4(%arg0: i32) -> (i32, i32) {
    %c0_i32 = arith.constant 0 : i32
    %c0_i32_0 = arith.constant 0 : i32
    %c0_i32_1 = arith.constant 0 : i32
    return %c0_i32, %c0_i32_0 : i32, i32
  }
  func.func @transform_5(%arg0: i32) -> (i32, i32) {
    %c0_i32 = arith.constant 0 : i32
    %c0_i32_0 = arith.constant 0 : i32
    %c0_i32_1 = arith.constant 0 : i32
    return %c0_i32, %c0_i32_0 : i32, i32
  }
  func.func @transform_6(%arg0: i32) -> (i32, i32) {
    %c0_i32 = arith.constant 0 : i32
    %c0_i32_0 = arith.constant 0 : i32
    %c0_i32_1 = arith.constant 0 : i32
    return %c0_i32, %c0_i32_0 : i32, i32
  }
  func.func @transform_7(%arg0: i32) -> (i32, i32) {
    %c0_i32 = arith.constant 0 : i32
    %c0_i32_0 = arith.constant 0 : i32
    %c0_i32_1 = arith.constant 0 : i32
    return %c0_i32, %c0_i32_0 : i32, i32
  }
}

</mosaic_0001>

<llo_original>
// kernel: edm_forward.1
$region0: #{edm_forward.1}
  #allocation0 [shape = 'u32[]', space=smem, size = 0x4, offset = 0x4, fixed_abs, tag = 'smem constant byte address 0x4 - core index']
  #allocation1 [shape = 'u32[144,128]{1,0:T(1,128)}', space=vmem, size = 0x12000, scoped, tag = 'internal scratch']
  %s0 = inlined_call_operand.vmem [shape: f32[16,19], index: 0, kind: input, shape index: {}]
  %s1 = inlined_call_operand.vmem [shape: f32[16,4], index: 1, kind: input, shape index: {}]
  %s2 = inlined_call_operand.vmem [shape: f32[4,8], index: 2, kind: input, shape index: {}]
  %s3 = inlined_call_operand.vmem [shape: bf16[10,32], index: 3, kind: input, shape index: {}]
  %s4 = inlined_call_operand.vmem [shape: f32[1,32], index: 4, kind: input, shape index: {}]
  %s5 = inlined_call_operand.vmem [shape: bf16[32,8], index: 5, kind: input, shape index: {}]
  %s6 = inlined_call_operand.vmem [shape: f32[1,8], index: 6, kind: input, shape index: {}]
  %s7 = inlined_call_operand.vmem [shape: f32[4,8], index: 7, kind: output, shape index: {}]
  %s8 = sld [smem:[#allocation0]]
  $region38: #{edm_forward.1} parent=0
    _
  %s10 = ssub.s32 1, %s8
  %s11 = scalar_select 0, %s10, %s8
  // Predicated region
  $region2: #{edm_forward.1} parent=0 // pred_check
    _
  $region3: #{edm_forward.1} parent=0 // pred_check_branch
    %13 = sbr.rel (0) target = $region5
  $region4: #{edm_forward.1} parent=0 // pred_region
    _
  $region5: #{edm_forward.1} parent=0 // pred_fallthru
    _
  // Predicated region
  $region6: #{edm_forward.1} parent=0 // pred_check
    _
  $region7: #{edm_forward.1} parent=0 // pred_check_branch
    %15 = sbr.rel (0) target = $region9
  $region8: #{edm_forward.1} parent=0 // pred_region
    _
  $region9: #{edm_forward.1} parent=0 // pred_fallthru
    _
  // Predicated region
  $region10: #{edm_forward.1} parent=0 // pred_check
    _
  $region11: #{edm_forward.1} parent=0 // pred_check_branch
    %17 = sbr.rel (0) target = $region13
  $region12: #{edm_forward.1} parent=0 // pred_region
    _
  $region13: #{edm_forward.1} parent=0 // pred_fallthru
    _
  // Predicated region
  $region14: #{edm_forward.1} parent=0 // pred_check
    _
  $region15: #{edm_forward.1} parent=0 // pred_check_branch
    %19 = sbr.rel (0) target = $region17
  $region16: #{edm_forward.1} parent=0 // pred_region
    _
  $region17: #{edm_forward.1} parent=0 // pred_fallthru
    _
  // Predicated region
  $region18: #{edm_forward.1} parent=0 // pred_check
    _
  $region19: #{edm_forward.1} parent=0 // pred_check_branch
    %21 = sbr.rel (0) target = $region21
  $region20: #{edm_forward.1} parent=0 // pred_region
    _
  $region21: #{edm_forward.1} parent=0 // pred_fallthru
    _
  // Predicated region
  $region22: #{edm_forward.1} parent=0 // pred_check
    _
  $region23: #{edm_forward.1} parent=0 // pred_check_branch
    %23 = sbr.rel (0) target = $region25
  $region24: #{edm_forward.1} parent=0 // pred_region
    _
  $region25: #{edm_forward.1} parent=0 // pred_fallthru
    _
  // Predicated region
  $region26: #{edm_forward.1} parent=0 // pred_check
    _
  $region27: #{edm_forward.1} parent=0 // pred_check_branch
    %25 = sbr.rel (0) target = $region29
  $region28: #{edm_forward.1} parent=0 // pred_region
    _
  $region29: #{edm_forward.1} parent=0 // pred_fallthru
    _
  %v27 = vld [vmem:[%s0] sm:$0xff]
  %v28 = vld [vmem:[%s0 + $0x8] sm:$0xff]
  %v29 = vld [vmem:[%s1] sm:$0xff]
  %v30 = vld [vmem:[%s1 + $0x8] sm:$0xff]
  %v31 = vld [vmem:[%s2] sm:$0xf]
  %v32 = vlaneseq
  %v33 = vand.u32 %v32, 127
  %vm34 = vcmp.lt.s32.totalorder %v33, 3
  %v35 = vsel %vm34, 0.5, 0.25
  %v36 = vmul.f32 %v27, %v35
  %v37 = vmul.f32 %v28, %v35
  %vm38 = vcmask 31744
  %v40 = vsel %vm38, %v29, 0
  %v43 = vsel %vm38, %v30, 0
  %vm45 = vcmask 1043456
  %v47 = vsel %vm45, %v31, 0
  %49 = vmatprep.subr.mxu0 0.0
  %50 = vmatpush1.msra.mxu0 %v47
  %51 = vmatprep.subr.mxu0 0.0
  %52 = vmatpush1.msra.mxu0 0.0
  %53 = vmatprep.subr.mxu0 0.0
  %54 = vmatpush1.msra.mxu0 0.0
  %55 = vmatprep.subr.mxu0 0.0
  %56 = vmatpush1.msra.mxu0 0.0
  %57 = vmatprep.subr.mxu0 0.0
  %58 = vmatpush1.msra.mxu0 0.0
  %59 = vmatprep.subr.mxu0 0.0
  %60 = vmatpush1.msra.mxu0 0.0
  %61 = vmatprep.subr.mxu0 0.0
  %62 = vmatpush1.msra.mxu0 0.0
  %63 = vmatprep.subr.mxu0 0.0
  %64 = vmatpush1.msra.mxu0 0.0
  %65 = vmatprep.subr.mxu0 0.0
  %66 = vmatpush1.msra.mxu0 0.0
  %67 = vmatprep.subr.mxu0 0.0
  %68 = vmatpush1.msra.mxu0 0.0
  %69 = vmatprep.subr.mxu0 0.0
  %70 = vmatpush1.msra.mxu0 0.0
  %71 = vmatprep.subr.mxu0 0.0
  %72 = vmatpush1.msra.mxu0 0.0
  %73 = vmatprep.subr.mxu0 0.0
  %74 = vmatpush1.msra.mxu0 0.0
  %75 = vmatprep.subr.mxu0 0.0
  %76 = vmatpush1.msra.mxu0 0.0
  %77 = vmatprep.subr.mxu0 0.0
  %78 = vmatpush1.msra.mxu0 0.0
  %79 = vmatprep.subr.mxu0 0.0
  %80 = vmatpush1.msra.mxu0 0.0
  %81 = vmatprep.subr.mxu0 0.0
  %82 = vmatpush1.msra.mxu0 0.0
  %83 = vmatprep.subr.mxu0 0.0
  %84 = vmatpush1.msra.mxu0 0.0
  %85 = vmatprep.subr.mxu0 0.0
  %86 = vmatpush1.msra.mxu0 0.0
  %87 = vmatprep.subr.mxu0 0.0
  %88 = vmatpush1.msra.mxu0 0.0
  %89 = vmatprep.subr.mxu0 0.0
  %90 = vmatpush1.msra.mxu0 0.0
  %91 = vmatprep.subr.mxu0 0.0
  %92 = vmatpush1.msra.mxu0 0.0
  %93 = vmatprep.subr.mxu0 0.0
  %94 = vmatpush1.msra.mxu0 0.0
  %95 = vmatprep.subr.mxu0 0.0
  %96 = vmatpush1.msra.mxu0 0.0
  %97 = vmatprep.subr.mxu0 0.0
  %98 = vmatpush1.msra.mxu0 0.0
  %99 = vmatprep.subr.mxu0 0.0
  %100 = vmatpush1.msra.mxu0 0.0
  %101 = vmatprep.subr.mxu0 0.0
  %102 = vmatpush1.msra.mxu0 0.0
  %103 = vmatprep.subr.mxu0 0.0
  %104 = vmatpush1.msra.mxu0 0.0
  %105 = vmatprep.subr.mxu0 0.0
  %106 = vmatpush1.msra.mxu0 0.0
  %107 = vmatprep.subr.mxu0 0.0
  %108 = vmatpush1.msra.mxu0 0.0
  %109 = vmatprep.subr.mxu0 0.0
  %110 = vmatpush1.msra.mxu0 0.0
  %111 = vmatprep.subr.mxu0 0.0
  %112 = vmatpush1.msra.mxu0 0.0
  %113 = vmatprep.mubr.f32.mxu0 0.0
  %114 = vmatmul.mubr.f32.gmra.mrb[0].mxu0 %v40
  %v115 = vpop.f32.mrb[0].mxu0
  %v116 = vadd.f32 0.0, %v115
  %v117 = vpop.f32.mrb[0].mxu0
  %118 = vmatprep.mubr.f32.mxu0 0.0
  %119 = vmatmul.mubr.f32.gmra.mrb[0].mxu0 %v43
  %v120 = vpop.f32.mrb[0].mxu0
  %v121 = vadd.f32 0.0, %v120
  %v122 = vpop.f32.mrb[0].mxu0
  %123 = vdwg.mxu0
  %v124 = vxor.u32 %v116, 2147483648
  %v125 = vxor.u32 %v121, 2147483648
  %v126 = vmul.f32 %v124, 1.442695
  %v127 = vpow.pop %v126
  %v128 = vmul.f32 %v125, 1.442695
  %v129 = vpow.pop %v128
  %v130 = vadd.f32 %v127, 1.0
  %v131 = vadd.f32 %v129, 1.0
  %v132 = vrcp.pop %v130
  %v133 = vmul.f32 1.0, %v132
  %v134 = vrcp.pop %v131
  %v135 = vmul.f32 1.0, %v134
  %v136 = vsub.f32 0.0, %v116
  %v137 = vsub.f32 0.0, %v121
  %v138 = vxor.u32 %v136, 2147483648
  %v139 = vxor.u32 %v137, 2147483648
  %v140 = vmul.f32 %v138, 1.442695
  %v141 = vpow.pop %v140
  %v142 = vmul.f32 %v139, 1.442695
  %v143 = vpow.pop %v142
  %v144 = vadd.f32 %v141, 1.0
  %v145 = vadd.f32 %v143, 1.0
  %v146 = vrcp.pop %v144
  %v147 = vmul.f32 1.0, %v146
  %v148 = vrcp.pop %v145
  %v149 = vmul.f32 1.0, %v148
  %v150 = vrsqrt.pop %v147
  %v151 = vmul.f32 %v147, %v150
  %vm152 = vcmp.eq.f32.partialorder %v147, inf
  %v153 = vsel %vm152, %v147, %v151
  %vm154 = vcmp.eq.f32.partialorder %v147, 0.0
  %v155 = vand.u32 %v147, 2147483648
  %v156 = vsel %vm154, %v155, %v153
  %v157 = vrsqrt.pop %v149
  %v158 = vmul.f32 %v149, %v157
  %vm159 = vcmp.eq.f32.partialorder %v149, inf
  %v160 = vsel %vm159, %v149, %v158
  %vm161 = vcmp.eq.f32.partialorder %v149, 0.0
  %v162 = vand.u32 %v149, 2147483648
  %v163 = vsel %vm161, %v162, %v160
  %v164 = vrsqrt.pop %v133
  %v165 = vmul.f32 %v133, %v164
  %vm166 = vcmp.eq.f32.partialorder %v133, inf
  %v167 = vsel %vm166, %v133, %v165
  %vm168 = vcmp.eq.f32.partialorder %v133, 0.0
  %v169 = vand.u32 %v133, 2147483648
  %v170 = vsel %vm168, %v169, %v167
  %v171 = vrsqrt.pop %v135
  %v172 = vmul.f32 %v135, %v171
  %vm173 = vcmp.eq.f32.partialorder %v135, inf
  %v174 = vsel %vm173, %v135, %v172
  %vm175 = vcmp.eq.f32.partialorder %v135, 0.0
  %v176 = vand.u32 %v135, 2147483648
  %v177 = vsel %vm175, %v176, %v174
  %179 = vset.pattern.permute.xlu0 16
  %180 = vperm.xlu0 %179, %v27
  %v181 = vpop.permute.xlu0 %180
  %184 = vset.pattern.permute.xlu0 16
  %185 = vperm.xlu0 %184, %v28
  %v186 = vpop.permute.xlu0 %185
  %v188 = vmul.f32 %v27, %v181
  %v189 = vmul.f32 %v28, %v186
  %191 = vset.pattern.permute.xlu0 0
  %192 = vperm.xlu0 %191, %v156
  %v193 = vpop.permute.xlu0 %192
  %196 = vset.pattern.permute.xlu0 0
  %197 = vperm.xlu0 %196, %v163
  %v198 = vpop.permute.xlu0 %197
  %v200 = vmul.f32 %v193, %v36
  %v201 = vmul.f32 %v198, %v37
  %203 = vset.pattern.permute.xlu0 0
  %204 = vperm.xlu0 %203, %v170
  %v205 = vpop.permute.xlu0 %204
  %208 = vset.pattern.permute.xlu0 0
  %209 = vperm.xlu0 %208, %v177
  %v210 = vpop.permute.xlu0 %209
  %v212 = vmul.f32 %v205, %v188
  %v213 = vmul.f32 %v210, %v189
  %216 = vrot.lane.b32.xlu0 %v212, 120
  %v217 = vpop.permute.xlu0 %216
  %218 = vrot.lane.b32.xlu0 %v213, 120
  %v219 = vpop.permute.xlu0 %218
  %v222 = vadd.f32 %v200, %v217
  %v223 = vadd.f32 %v201, %v219
  %224 = vset.pattern.permute.xlu0 17
  %225 = vperm.xlu0 %224, %v27
  %v226 = vpop.permute.xlu0 %225
  %228 = vset.pattern.permute.xlu0 17
  %229 = vperm.xlu0 %228, %v28
  %v230 = vpop.permute.xlu0 %229
  %v232 = vmul.f32 %v36, %v226
  %v233 = vmul.f32 %v37, %v230
  %v234 = vmul.f32 %v222, %v181
  %v235 = vmul.f32 %v223, %v186
  %v236 = vadd.f32 %v232, %v234
  %v237 = vadd.f32 %v233, %v235
  %v238 = vld [vmem:[%s3] sm:$0xf]
  %v239 = vld [vmem:[%s3 + $0x4] sm:$0x1]
  %v240 = vpack.c.bf16 %v237, %v236
  %v241 = vunpack.c.l.bf16 %v239
  %243 = vset.pattern.permute.xlu0 4
  %244 = vperm.xlu0 %243, %v116
  %v245 = vpop.permute.xlu0 %244
  %248 = vset.pattern.permute.xlu0 4
  %249 = vperm.xlu0 %248, %v121
  %v250 = vpop.permute.xlu0 %249
  %v252 = vlaneseq
  %v253 = vshrl.u32 %v252, 7
  %v254 = vsub.s32 0, %v253
  %v255 = vrot.slane %v241, %v254
  %v256 = vmul.f32 %v245, %v255
  %v257 = vmul.f32 %v250, %v255
  %vm258 = vcmask 64512
  %v260 = vsel %vm258, %v240, 0
  %v263 = vsel %vm45, %v238, 0
  %265 = vmatprep.subr.bf16.mxu0 0
  %266 = vmatpush1.bf16.msra.mxu0 %v263
  %267 = vmatprep.subr.bf16.mxu0 0
  %268 = vmatpush1.bf16.msra.mxu0 0
  %269 = vmatprep.subr.bf16.mxu0 0
  %270 = vmatpush1.bf16.msra.mxu0 0
  %271 = vmatprep.subr.bf16.mxu0 0
  %272 = vmatpush1.bf16.msra.mxu0 0
  %273 = vmatprep.subr.bf16.mxu0 0
  %274 = vmatpush1.bf16.msra.mxu0 0
  %275 = vmatprep.subr.bf16.mxu0 0
  %276 = vmatpush1.bf16.msra.mxu0 0
  %277 = vmatprep.subr.bf16.mxu0 0
  %278 = vmatpush1.bf16.msra.mxu0 0
  %279 = vmatprep.subr.bf16.mxu0 0
  %280 = vmatpush1.bf16.msra.mxu0 0
  %281 = vmatprep.subr.bf16.mxu0 0
  %282 = vmatpush1.bf16.msra.mxu0 0
  %283 = vmatprep.subr.bf16.mxu0 0
  %284 = vmatpush1.bf16.msra.mxu0 0
  %285 = vmatprep.subr.bf16.mxu0 0
  %286 = vmatpush1.bf16.msra.mxu0 0
  %287 = vmatprep.subr.bf16.mxu0 0
  %288 = vmatpush1.bf16.msra.mxu0 0
  %289 = vmatprep.subr.bf16.mxu0 0
  %290 = vmatpush1.bf16.msra.mxu0 0
  %291 = vmatprep.subr.bf16.mxu0 0
  %292 = vmatpush1.bf16.msra.mxu0 0
  %293 = vmatprep.subr.bf16.mxu0 0
  %294 = vmatpush1.bf16.msra.mxu0 0
  %295 = vmatprep.subr.bf16.mxu0 0
  %296 = vmatpush1.bf16.msra.mxu0 0
  %297 = vmatprep.mubr.bf16.mxu0 0
  %298 = vmatmul.mubr.bf16.gmra.mrb[0].mxu0 %v260
  %v299 = vpop.f32.mrb[0].mxu0
  %v300 = vadd.f32 %v256, %v299
  %v301 = vpop.f32.mrb[0].mxu0
  %v302 = vpop.f32.mrb[0].mxu0
  %v303 = vadd.f32 %v257, %v302
  %v304 = vpop.f32.mrb[0].mxu0
  %305 = vdwg.mxu0
  %306 = vset.pattern.permute.xlu0 18
  %307 = vperm.xlu0 %306, %v27
  %v308 = vpop.permute.xlu0 %307
  %310 = vset.pattern.permute.xlu0 18
  %311 = vperm.xlu0 %310, %v28
  %v312 = vpop.permute.xlu0 %311
  %v314 = vlaneseq
  %v315 = vshrl.u32 %v314, 7
  %v316 = vsub.s32 1, %v315
  %v317 = vrot.slane %v241, %v316
  %v318 = vmul.f32 %v308, %v317
  %v319 = vmul.f32 %v312, %v317
  %v320 = vadd.f32 %v300, %v318
  %v321 = vadd.f32 %v303, %v319
  %v322 = vld [vmem:[%s4] sm:$0x1]
  %v324 = vlaneseq
  %v325 = vshrl.u32 %v324, 7
  %v326 = vsub.s32 0, %v325
  %v327 = vrot.slane %v322, %v326
  %v329 = vadd.f32 %v320, %v327
  %v330 = vadd.f32 %v321, %v327
  %v331 = vtanh.pop %v329
  %v332 = vtanh.pop %v330
  %v333 = vpack.c.bf16 %v332, %v331
  %v334 = vld [vmem:[%s5] sm:$0xf]
  %v335 = vld [vmem:[%s5 + $0x4] sm:$0xf]
  %v336 = vld [vmem:[%s5 + $0x8] sm:$0xf]
  %v337 = vld [vmem:[%s5 + $0xc] sm:$0xf]
  %v338 = vld [vmem:[%s6] sm:$0x1]
  %v340 = vlaneseq
  %v341 = vshrl.u32 %v340, 7
  %v342 = vsub.s32 0, %v341
  %v343 = vrot.slane %v338, %v342
  %v349 = vunpack.c.l.b16 %v334
  %v350 = vunpack.c.l.b16 %v335
  %v351 = vunpack.c.l.b16 %v336
  %v352 = vunpack.c.l.b16 %v337
  %v353 = vpack.c.b16 %v350, %v349
  %v354 = vpack.c.b16 %v352, %v351
  %vm357 = vcmask 261120
  %v359 = vsel %vm357, %v333, 0
  %361 = vmatprep.subr.bf16.mxu0 0
  %362 = vmatpush1.bf16.msra.mxu0 %v353
  %363 = vmatprep.subr.bf16.mxu0 0
  %364 = vmatpush1.bf16.msra.mxu0 %v354
  %365 = vmatprep.subr.bf16.mxu0 0
  %366 = vmatpush1.bf16.msra.mxu0 0
  %367 = vmatprep.subr.bf16.mxu0 0
  %368 = vmatpush1.bf16.msra.mxu0 0
  %369 = vmatprep.subr.bf16.mxu0 0
  %370 = vmatpush1.bf16.msra.mxu0 0
  %371 = vmatprep.subr.bf16.mxu0 0
  %372 = vmatpush1.bf16.msra.mxu0 0
  %373 = vmatprep.subr.bf16.mxu0 0
  %374 = vmatpush1.bf16.msra.mxu0 0
  %375 = vmatprep.subr.bf16.mxu0 0
  %376 = vmatpush1.bf16.msra.mxu0 0
  %377 = vmatprep.subr.bf16.mxu0 0
  %378 = vmatpush1.bf16.msra.mxu0 0
  %379 = vmatprep.subr.bf16.mxu0 0
  %380 = vmatpush1.bf16.msra.mxu0 0
  %381 = vmatprep.subr.bf16.mxu0 0
  %382 = vmatpush1.bf16.msra.mxu0 0
  %383 = vmatprep.subr.bf16.mxu0 0
  %384 = vmatpush1.bf16.msra.mxu0 0
  %385 = vmatprep.subr.bf16.mxu0 0
  %386 = vmatpush1.bf16.msra.mxu0 0
  %387 = vmatprep.subr.bf16.mxu0 0
  %388 = vmatpush1.bf16.msra.mxu0 0
  %389 = vmatprep.subr.bf16.mxu0 0
  %390 = vmatpush1.bf16.msra.mxu0 0
  %391 = vmatprep.subr.bf16.mxu0 0
  %392 = vmatpush1.bf16.msra.mxu0 0
  %393 = vmatprep.mubr.bf16.mxu0 0
  %394 = vmatmul.mubr.bf16.gmra.mrb[0].mxu0 %v359
  %v395 = vpop.f32.mrb[0].mxu0
  %v396 = vadd.f32 %v343, %v395
  %v397 = vpop.f32.mrb[0].mxu0
  %v398 = vpop.f32.mrb[0].mxu0
  %v399 = vadd.f32 %v343, %v398
  %v400 = vpop.f32.mrb[0].mxu0
  %401 = vdwg.mxu0
  %v402 = vmul.f32 %v396, %v181
  %v403 = vmul.f32 %v399, %v186
  %406 = vrot.lane.b32.xlu0 %v402, 8
  %v407 = vpop.permute.xlu0 %406
  %408 = vrot.lane.b32.xlu0 %v403, 8
  %v409 = vpop.permute.xlu0 %408
  %v412 = vsub.f32 %v188, %v407
  %v413 = vsub.f32 %v189, %v409
  %v414 = vmul.f32 %v412, %v412
  %v415 = vmul.f32 %v413, %v413
  %416 = vset.pattern.permute.xlu0 3
  %417 = vperm.xlu0 %416, %v156
  %v418 = vpop.permute.xlu0 %417
  %420 = vset.pattern.permute.xlu0 3
  %421 = vperm.xlu0 %420, %v163
  %v422 = vpop.permute.xlu0 %421
  %v424 = vmul.f32 %v418, %v36
  %v425 = vmul.f32 %v422, %v37
  %v426 = vmul.f32 %v424, %v424
  %v427 = vmul.f32 %v425, %v425
  %v428 = vmul.f32 %v426, %v181
  %v429 = vmul.f32 %v427, %v186
  %v430 = vmul.f32 %v36, 4.0
  %v431 = vmul.f32 %v37, 4.0
  %v432 = vadd.f32 %v430, 0.0
  %v433 = vadd.f32 %v431, 0.0
  %v434 = vmul.f32 %v236, 4.0
  %v435 = vmul.f32 %v237, 4.0
  %v436 = vadd.f32 %v434, 0.0
  %v437 = vadd.f32 %v435, 0.0
  %v438 = vsub.f32 %v436, 1.0
  %v439 = vsub.f32 %v437, 1.0
  %v440 = vmul.f32 %v170, 4.0
  %v441 = vmul.f32 %v177, 4.0
  %v442 = vrcp.pop %v440
  %v443 = vrcp.pop %v441
  %v444 = vadd.f32 %v438, 0.5
  %v445 = vadd.f32 %v439, 0.5
  %447 = vset.pattern.permute.xlu0 0
  %448 = vperm.xlu0 %447, %v442
  %v449 = vpop.permute.xlu0 %448
  %452 = vset.pattern.permute.xlu0 0
  %453 = vperm.xlu0 %452, %v443
  %v454 = vpop.permute.xlu0 %453
  %v456 = vmul.f32 %v444, %v449
  %v457 = vmul.f32 %v445, %v454
  %v458 = vmul.f32 %v456, 0.70710677
  %v459 = vmul.f32 %v457, 0.70710677
  %vm460 = vcmp.ge.f32.partialorder %v458, 0.0
  %vm461 = vcmp.ge.f32.partialorder %v459, 0.0
  %v462 = vsel %vm460, 1.0, -1.0
  %v463 = vsel %vm461, 1.0, -1.0
  %v464 = vand.u32 2147483647, %v458
  %v465 = vand.u32 2147483647, %v459
  %v466 = vmul.f32 %v464, 0.3275911
  %v467 = vmul.f32 %v465, 0.3275911
  %v468 = vadd.f32 %v466, 1.0
  %v469 = vadd.f32 %v467, 1.0
  %v470 = vrcp.pop %v468
  %v471 = vrcp.pop %v469
  %v472 = vmul.f32 %v470, 1.0614054
  %v473 = vmul.f32 %v471, 1.0614054
  %v474 = vadd.f32 %v472, -1.4531521
  %v475 = vadd.f32 %v473, -1.4531521
  %v476 = vmul.f32 %v474, %v470
  %v477 = vmul.f32 %v475, %v471
  %v478 = vadd.f32 %v476, 1.4214138
  %v479 = vadd.f32 %v477, 1.4214138
  %v480 = vmul.f32 %v478, %v470
  %v481 = vmul.f32 %v479, %v471
  %v482 = vadd.f32 %v480, -0.28449672
  %v483 = vadd.f32 %v481, -0.28449672
  %v484 = vmul.f32 %v482, %v470
  %v485 = vmul.f32 %v483, %v471
  %v486 = vadd.f32 %v484, 0.2548296
  %v487 = vadd.f32 %v485, 0.2548296
  %v488 = vmul.f32 %v486, %v470
  %v489 = vmul.f32 %v487, %v471
  %v490 = vsub.f32 0.0, %v464
  %v491 = vsub.f32 0.0, %v465
  %v492 = vmul.f32 %v490, %v464
  %v493 = vmul.f32 %v491, %v465
  %v494 = vmul.f32 %v492, 1.442695
  %v495 = vpow.pop %v494
  %v496 = vmul.f32 %v493, 1.442695
  %v497 = vpow.pop %v496
  %v498 = vmul.f32 %v488, %v495
  %v499 = vmul.f32 %v489, %v497
  %v500 = vsub.f32 1.0, %v498
  %v501 = vsub.f32 1.0, %v499
  %v502 = vmul.f32 %v462, %v500
  %v503 = vmul.f32 %v463, %v501
  %v504 = vadd.f32 %v502, 1.0
  %v505 = vadd.f32 %v503, 1.0
  %v506 = vmul.f32 %v504, 0.5
  %v507 = vmul.f32 %v505, 0.5
  %v508 = vsub.f32 %v438, 0.5
  %v509 = vsub.f32 %v439, 0.5
  %v510 = vmul.f32 %v508, %v449
  %v511 = vmul.f32 %v509, %v454
  %v512 = vmul.f32 %v510, 0.70710677
  %v513 = vmul.f32 %v511, 0.70710677
  %vm514 = vcmp.ge.f32.partialorder %v512, 0.0
  %vm515 = vcmp.ge.f32.partialorder %v513, 0.0
  %v516 = vsel %vm514, 1.0, -1.0
  %v517 = vsel %vm515, 1.0, -1.0
  %v518 = vand.u32 2147483647, %v512
  %v519 = vand.u32 2147483647, %v513
  %v520 = vmul.f32 %v518, 0.3275911
  %v521 = vmul.f32 %v519, 0.3275911
  %v522 = vadd.f32 %v520, 1.0
  %v523 = vadd.f32 %v521, 1.0
  %v524 = vrcp.pop %v522
  %v525 = vrcp.pop %v523
  %v526 = vmul.f32 %v524, 1.0614054
  %v527 = vmul.f32 %v525, 1.0614054
  %v528 = vadd.f32 %v526, -1.4531521
  %v529 = vadd.f32 %v527, -1.4531521
  %v530 = vmul.f32 %v528, %v524
  %v531 = vmul.f32 %v529, %v525
  %v532 = vadd.f32 %v530, 1.4214138
  %v533 = vadd.f32 %v531, 1.4214138
  %v534 = vmul.f32 %v532, %v524
  %v535 = vmul.f32 %v533, %v525
  %v536 = vadd.f32 %v534, -0.28449672
  %v537 = vadd.f32 %v535, -0.28449672
  %v538 = vmul.f32 %v536, %v524
  %v539 = vmul.f32 %v537, %v525
  %v540 = vadd.f32 %v538, 0.2548296
  %v541 = vadd.f32 %v539, 0.2548296
  %v542 = vmul.f32 %v540, %v524
  %v543 = vmul.f32 %v541, %v525
  %v544 = vsub.f32 0.0, %v518
  %v545 = vsub.f32 0.0, %v519
  %v546 = vmul.f32 %v544, %v518
  %v547 = vmul.f32 %v545, %v519
  %v548 = vmul.f32 %v546, 1.442695
  %v549 = vpow.pop %v548
  %v550 = vmul.f32 %v547, 1.442695
  %v551 = vpow.pop %v550
  %v552 = vmul.f32 %v542, %v549
  %v553 = vmul.f32 %v543, %v551
  %v554 = vsub.f32 1.0, %v552
  %v555 = vsub.f32 1.0, %v553
  %v556 = vmul.f32 %v516, %v554
  %v557 = vmul.f32 %v517, %v555
  %v558 = vadd.f32 %v556, 1.0
  %v559 = vadd.f32 %v557, 1.0
  %v560 = vmul.f32 %v558, 0.5
  %v561 = vmul.f32 %v559, 0.5
  %v562 = vsub.f32 %v506, %v560
  %v563 = vsub.f32 %v507, %v561
  %v564 = vadd.f32 %v562, 1e-10
  %v565 = vadd.f32 %v563, 1e-10
  %v566 = vlog2.pop %v564
  %v567 = vmul.f32 %v566, 0.6931472
  %v568 = vlog2.pop %v565
  %v569 = vmul.f32 %v568, 0.6931472
  %vm570 = vcmask 64536
  %v571 = vsel %vm570, %v567, -inf
  %572 = vmax.xlane.f32.xlu0 %v571
  %v573 = vpop.xlane.xlu0 %572
  %v574 = vsel %vm570, %v569, -inf
  %575 = vmax.xlane.f32.xlu0 %v574
  %v576 = vpop.xlane.xlu0 %575
  %v577 = vsub.f32 %v567, %v573
  %v578 = vsub.f32 %v569, %v576
  %v579 = vmul.f32 %v577, 1.442695
  %v580 = vpow.pop %v579
  %v581 = vmul.f32 %v578, 1.442695
  %v582 = vpow.pop %v581
  %585 = vrot.lane.b32.xlu0 %v580, 125
  %v586 = vpop.permute.xlu0 %585
  %587 = vrot.lane.b32.xlu0 %v582, 125
  %v588 = vpop.permute.xlu0 %587
  %vm591 = vcmask 39936
  %v592 = vsel %vm591, %v586, 0.0
  %593 = vadd.xlane.f32.xlu0 %v592
  %v594 = vpop.xlane.xlu0 %593
  %v595 = vsel %vm591, %v588, 0.0
  %596 = vadd.xlane.f32.xlu0 %v595
  %v597 = vpop.xlane.xlu0 %596
  %v598 = vlog2.pop %v594
  %v599 = vmul.f32 %v598, 0.6931472
  %v600 = vlog2.pop %v597
  %v601 = vmul.f32 %v600, 0.6931472
  %v602 = vadd.f32 %v573, %v599
  %v603 = vadd.f32 %v576, %v601
  %v604 = vsub.f32 %v567, %v602
  %v605 = vsub.f32 %v569, %v603
  %v606 = vmul.f32 %v604, %v432
  %v607 = vmul.f32 %v605, %v433
  %v608 = vmul.f32 %v606, %v181
  %v609 = vmul.f32 %v607, %v186
  %610 = vrot.lane.b32.xlu0 %v27, 112
  %v611 = vpop.permute.xlu0 %610
  %612 = vrot.lane.b32.xlu0 %v28, 112
  %v613 = vpop.permute.xlu0 %612
  %618 = vrot.lane.b32.xlu0 %v414, 121
  %v619 = vpop.permute.xlu0 %618
  %620 = vrot.lane.b32.xlu0 %v415, 121
  %v621 = vpop.permute.xlu0 %620
  %626 = vrot.lane.b32.xlu0 %v428, 9
  %v627 = vpop.permute.xlu0 %626
  %628 = vrot.lane.b32.xlu0 %v429, 9
  %v629 = vpop.permute.xlu0 %628
  %634 = vrot.lane.b32.xlu0 %v608, 14
  %v635 = vpop.permute.xlu0 %634
  %636 = vrot.lane.b32.xlu0 %v609, 14
  %v637 = vpop.permute.xlu0 %636
  %vm640 = vcmask 7168
  %v641 = vsel %vm640, %v611, %v619
  %v642 = vsel %vm640, %v613, %v621
  %vm643 = vcmask 72704
  %v644 = vsel %vm643, %v641, %v627
  %v645 = vsel %vm643, %v642, %v629
  %vm646 = vcmask 138240
  %v647 = vsel %vm646, %v644, %v635
  %v648 = vsel %vm646, %v645, %v637
  %649 = vxpose.xlu0.b32.start [1/16] %v29, 128
  %650 = vxpose.xlu0.b32.cont [2/16] %v30, 128
  %651 = vxpose.xlu0.b32.cont [3/16] 0.0, 128
  %652 = vxpose.xlu0.b32.cont [4/16] 0.0, 128
  %653 = vxpose.xlu0.b32.cont [5/16] 0.0, 128
  %654 = vxpose.xlu0.b32.cont [6/16] 0.0, 128
  %655 = vxpose.xlu0.b32.cont [7/16] 0.0, 128
  %656 = vxpose.xlu0.b32.cont [8/16] 0.0, 128
  %657 = vxpose.xlu0.b32.cont [9/16] 0.0, 128
  %658 = vxpose.xlu0.b32.cont [10/16] 0.0, 128
  %659 = vxpose.xlu0.b32.cont [11/16] 0.0, 128
  %660 = vxpose.xlu0.b32.cont [12/16] 0.0, 128
  %661 = vxpose.xlu0.b32.cont [13/16] 0.0, 128
  %662 = vxpose.xlu0.b32.cont [14/16] 0.0, 128
  %663 = vxpose.xlu0.b32.cont [15/16] 0.0, 128
  %664 = vxpose.xlu0.b32.end [16/16] 0.0, 128
  %v665 = vpop.trf.xlu0
  %v666 = vpop.trf.xlu0
  %v667 = vpop.trf.xlu0
  %v668 = vpop.trf.xlu0
  %v669 = vpop.trf.xlu0
  %v670 = vpop.trf.xlu0
  %v671 = vpop.trf.xlu0
  %v672 = vpop.trf.xlu0
  %v673 = vpop.trf.xlu0
  %v674 = vpop.trf.xlu0
  %v675 = vpop.trf.xlu0
  %v676 = vpop.trf.xlu0
  %v677 = vpop.trf.xlu0
  %v678 = vpop.trf.xlu0
  %v679 = vpop.trf.xlu0
  %v680 = vpop.trf.xlu0
  %vm681 = vcmask 130048
  %v683 = vsel %vm681, %v665, 0
  %685 = vmatprep.subr.mxu0 0.0
  %686 = vmatpush1.msra.mxu0 %v647
  %687 = vmatprep.subr.mxu0 0.0
  %688 = vmatpush1.msra.mxu0 %v648
  %689 = vmatprep.subr.mxu0 0.0
  %690 = vmatpush1.msra.mxu0 0.0
  %691 = vmatprep.subr.mxu0 0.0
  %692 = vmatpush1.msra.mxu0 0.0
  %693 = vmatprep.subr.mxu0 0.0
  %694 = vmatpush1.msra.mxu0 0.0
  %695 = vmatprep.subr.mxu0 0.0
  %696 = vmatpush1.msra.mxu0 0.0
  %697 = vmatprep.subr.mxu0 0.0
  %698 = vmatpush1.msra.mxu0 0.0
  %699 = vmatprep.subr.mxu0 0.0
  %700 = vmatpush1.msra.mxu0 0.0
  %701 = vmatprep.subr.mxu0 0.0
  %702 = vmatpush1.msra.mxu0 0.0
  %703 = vmatprep.subr.mxu0 0.0
  %704 = vmatpush1.msra.mxu0 0.0
  %705 = vmatprep.subr.mxu0 0.0
  %706 = vmatpush1.msra.mxu0 0.0
  %707 = vmatprep.subr.mxu0 0.0
  %708 = vmatpush1.msra.mxu0 0.0
  %709 = vmatprep.subr.mxu0 0.0
  %710 = vmatpush1.msra.mxu0 0.0
  %711 = vmatprep.subr.mxu0 0.0
  %712 = vmatpush1.msra.mxu0 0.0
  %713 = vmatprep.subr.mxu0 0.0
  %714 = vmatpush1.msra.mxu0 0.0
  %715 = vmatprep.subr.mxu0 0.0
  %716 = vmatpush1.msra.mxu0 0.0
  %717 = vmatprep.subr.mxu0 0.0
  %718 = vmatpush1.msra.mxu0 0.0
  %719 = vmatprep.subr.mxu0 0.0
  %720 = vmatpush1.msra.mxu0 0.0
  %721 = vmatprep.subr.mxu0 0.0
  %722 = vmatpush1.msra.mxu0 0.0
  %723 = vmatprep.subr.mxu0 0.0
  %724 = vmatpush1.msra.mxu0 0.0
  %725 = vmatprep.subr.mxu0 0.0
  %726 = vmatpush1.msra.mxu0 0.0
  %727 = vmatprep.subr.mxu0 0.0
  %728 = vmatpush1.msra.mxu0 0.0
  %729 = vmatprep.subr.mxu0 0.0
  %730 = vmatpush1.msra.mxu0 0.0
  %731 = vmatprep.subr.mxu0 0.0
  %732 = vmatpush1.msra.mxu0 0.0
  %733 = vmatprep.subr.mxu0 0.0
  %734 = vmatpush1.msra.mxu0 0.0
  %735 = vmatprep.subr.mxu0 0.0
  %736 = vmatpush1.msra.mxu0 0.0
  %737 = vmatprep.subr.mxu0 0.0
  %738 = vmatpush1.msra.mxu0 0.0
  %739 = vmatprep.subr.mxu0 0.0
  %740 = vmatpush1.msra.mxu0 0.0
  %741 = vmatprep.subr.mxu0 0.0
  %742 = vmatpush1.msra.mxu0 0.0
  %743 = vmatprep.subr.mxu0 0.0
  %744 = vmatpush1.msra.mxu0 0.0
  %745 = vmatprep.subr.mxu0 0.0
  %746 = vmatpush1.msra.mxu0 0.0
  %747 = vmatprep.subr.mxu0 0.0
  %748 = vmatpush1.msra.mxu0 0.0
  %749 = vmatprep.mubr.f32.mxu0 0.0
  %750 = vmatmul.mubr.f32.gmra.mrb[0].mxu0 %v683
  %v751 = vpop.f32.mrb[0].mxu0
  %v752 = vadd.f32 0.0, %v751
  %v753 = vpop.f32.mrb[0].mxu0
  %754 = vdwg.mxu0
  %756 = vrot.lane.b32.xlu0 %v752, 127
  %v757 = vpop.permute.xlu0 %756
  %vm759 = vcmask 60416
  %v760 = vsel %vm759, %v757, 0.0
  %761 = vadd.xlane.f32.xlu0 %v760
  %v762 = vpop.xlane.xlu0 %761
  %vm763 = vcmask 19456
  %v764 = vsel %vm763, %v757, 0.0
  %765 = vadd.xlane.f32.xlu0 %v764
  %v766 = vpop.xlane.xlu0 %765
  %767 = vrot.lane.b32.xlu0 %v752, 119
  %v768 = vpop.permute.xlu0 %767
  %v770 = vsel %vm763, %v768, 0.0
  %771 = vadd.xlane.f32.xlu0 %v770
  %v772 = vpop.xlane.xlu0 %771
  %773 = vrot.lane.b32.xlu0 %v752, 116
  %v774 = vpop.permute.xlu0 %773
  %vm776 = vcmask 35840
  %v777 = vsel %vm776, %v774, 0.0
  %778 = vadd.xlane.f32.xlu0 %v777
  %v779 = vpop.xlane.xlu0 %778
  %780 = vrot.lane.b32.xlu0 %v752, 111
  %v781 = vpop.permute.xlu0 %780
  %v783 = vsel %vm776, %v781, 0.0
  %784 = vadd.xlane.f32.xlu0 %v783
  %v785 = vpop.xlane.xlu0 %784
  %v786 = vsub.f32 1.0, %v31
  %v787 = vmul.f32 %v752, 3.0
  %v788 = vmul.f32 %v787, 0.6931472
  %789 = vrot.lane.b32.xlu0 %v31, 1
  %v790 = vpop.permute.xlu0 %789
  %v792 = vsub.f32 %v31, %v790
  %v793 = vsub.f32 0.0, %v792
  %v794 = vmul.f32 %v793, 1.442695
  %v795 = vpow.pop %v794
  %v796 = vsub.f32 %v795, 1.0
  %v797 = vsub.f32 %v752, 1.0
  %v798 = vmul.f32 %v797, 3.0
  %v799 = vmul.f32 %v31, 0.5
  %v800 = vsub.f32 0.0, %v799
  %v801 = vsub.f32 %v800, 0.9189385
  %803 = vrot.lane.b32.xlu0 %v801, 126
  %v804 = vpop.permute.xlu0 %803
  %v806 = vmul.f32 %v798, %v804
  %v807 = vsub.f32 0.0, %v806
  %v808 = vxor.u32 %v31, 2147483648
  %v809 = vmul.f32 %v808, 1.442695
  %v810 = vpow.pop %v809
  %v811 = vadd.f32 %v810, 1.0
  %v812 = vrcp.pop %v811
  %v813 = vmul.f32 1.0, %v812
  %v814 = vrsqrt.pop %v813
  %v815 = vmul.f32 %v813, %v814
  %vm816 = vcmp.eq.f32.partialorder %v813, inf
  %v817 = vsel %vm816, %v813, %v815
  %vm818 = vcmp.eq.f32.partialorder %v813, 0.0
  %v819 = vand.u32 %v813, 2147483648
  %v820 = vsel %vm818, %v819, %v817
  %v821 = vlog2.pop %v820
  %v822 = vmul.f32 %v821, 0.6931472
  %v823 = vsub.f32 0.0, %v822
  %v824 = vmul.f32 %v820, %v820
  %v825 = vadd.f32 %v824, %v779
  %v826 = vmul.f32 %v825, 0.5
  %v827 = vadd.f32 %v823, %v826
  %v828 = vsub.f32 %v827, 0.5
  %830 = vrot.lane.b32.xlu0 %v823, 125
  %v831 = vpop.permute.xlu0 %830
  %v833 = vmul.f32 %v798, %v831
  %835 = vrot.lane.b32.xlu0 %v824, 125
  %v836 = vpop.permute.xlu0 %835
  %v838 = vmul.f32 %v798, %v836
  %v839 = vadd.f32 %v838, %v772
  %v840 = vmul.f32 %v839, 0.5
  %v841 = vadd.f32 %v833, %v840
  %v842 = vmul.f32 %v798, 0.5
  %v843 = vsub.f32 %v841, %v842
  %845 = vrot.lane.b32.xlu0 %v828, 125
  %v846 = vpop.permute.xlu0 %845
  %v848 = vadd.f32 %v843, %v846
  %v849 = vmul.f32 %v766, -0.5
  %v850 = vsub.f32 0.0, %v849
  %v851 = vmul.f32 %v850, %v31
  %v852 = vsub.f32 0.0, %v785
  %v853 = vmul.f32 %v852, %v31
  %v854 = vmul.f32 %v762, %v786
  %856 = vrot.lane.b32.xlu0 %v854, 124
  %v857 = vpop.permute.xlu0 %856
  %860 = vrot.lane.b32.xlu0 %v796, 1
  %v861 = vpop.permute.xlu0 %860
  %864 = vrot.lane.b32.xlu0 %v851, 126
  %v865 = vpop.permute.xlu0 %864
  %868 = vrot.lane.b32.xlu0 %v853, 127
  %v869 = vpop.permute.xlu0 %868
  %872 = vrot.lane.b32.xlu0 %v807, 5
  %v873 = vpop.permute.xlu0 %872
  %876 = vrot.lane.b32.xlu0 %v848, 6
  %v877 = vpop.permute.xlu0 %876
  %v879 = vsel %vm640, %v788, %v857
  %vm880 = vcmask 15360
  %v881 = vsel %vm880, %v879, %v861
  %vm882 = vcmask 23552
  %v883 = vsel %vm882, %v881, %v865
  %v884 = vsel %vm38, %v883, %v869
  %v885 = vsel %vm591, %v884, %v873
  %vm886 = vcmask 48128
  %v887 = vsel %vm886, %v885, %v877
  %vm888 = vcmask 56320
  %v889 = vsel %vm888, %v887, 0.0
  %890 = vst.msk [vmem:[%s7] sm:$0xf] %vm759, %v889
  // Predicated region
  $region30: #{edm_forward.1} parent=0 // pred_check
    _
  $region31: #{edm_forward.1} parent=0 // pred_check_branch
    %892 = sbr.rel (0) target = $region33
  $region32: #{edm_forward.1} parent=0 // pred_region
    _
  $region33: #{edm_forward.1} parent=0 // pred_fallthru
    _
  // Predicated region
  $region34: #{edm_forward.1} parent=0 // pred_check
    _
  $region35: #{edm_forward.1} parent=0 // pred_check_branch
    %894 = sbr.rel (0) target = $region37
  $region36: #{edm_forward.1} parent=0 // pred_region
    _
  $region37: #{edm_forward.1} parent=0 // pred_fallthru
    _

</llo_original>
